<compile_context>
chip_gen: v7x
topology: tpu7x:2x2x1
jax: 0.10.0
libtpu: 0.0.40
codegen_flags: <defaults>
</compile_context>

<pallas_src>
import functools
import math

import jax
import jax.numpy as jnp
from jax.experimental import pallas as pl
from jax.experimental.pallas import tpu as pltpu


_LANE = 128     # lane width (last-dim tiling unit)
_SUBLANE = 8    # f32 sublane width (second-to-last-dim tiling unit)


def _round_up(x, m):
    return ((x + m - 1) // m) * m


def _divisor_tile(dim, unit, cap):
    """Largest multiple of `unit` that divides `dim` and is <= cap.

    `dim` is always a multiple of `unit` (feature dims are pre-padded to 128).
    """
    best = unit
    d = unit
    limit = min(dim, cap)
    while d <= limit:
        if dim % d == 0:
            best = d
        d += unit
    return best


def _tpu_generation_info():
    """Return (per-core VMEM bytes, TensorCores per chip), conservatively."""
    vmem = None
    cores = None
    try:
        info = pltpu.get_tpu_info()
        v = int(getattr(info, "vmem_capacity_bytes", 0) or 0)
        if v > 0:
            vmem = v
        for name in ("num_tensorcores", "tensorcore_count", "num_cores",
                     "cores_per_chip"):
            c = getattr(info, name, None)
            if c:
                cores = int(c)
                break
    except Exception:
        pass
    kind = ""
    try:
        kind = jax.devices()[0].device_kind.lower()
    except Exception:
        pass
    if vmem is None:
        # v7x: 64 MiB per TensorCore; v5e/v6e: 128 MiB.
        vmem = (64 << 20) if ("v7" in kind or "7x" in kind) else (128 << 20)
    if cores is None:
        cores = 2 if ("v7" in kind or "7x" in kind or vmem <= (64 << 20)) else 1
    return vmem, cores


# ----------------------------------------------------------------------------
# Fused (all weights resident) path
# ----------------------------------------------------------------------------
def _fused_mlp_kernel(*refs, n_layers, out_pads):
    """refs = (x_ref, w0, ..., w_{L-1}, bias_packed_ref, o_ref).

    The whole MLP executes in one kernel invocation: every intermediate
    activation lives in vregs/VMEM, only the final activation is written out.
    """
    x_ref = refs[0]
    w_refs = refs[1:1 + n_layers]
    b_ref = refs[1 + n_layers]          # packed (n_layers, max_out_pad)
    o_ref = refs[2 + n_layers]
    h = x_ref[...]
    for layer in range(n_layers):
        w = w_refs[layer][...]
        # MXU matmul with f32 accumulation (bf16 or f32 params both OK).
        acc = jnp.dot(h.astype(w.dtype), w, preferred_element_type=jnp.float32)
        # bias + ReLU epilogue in f32 vregs (v5e has no bf16 VALU). ReLU is
        # applied after the last layer too (PyTorch DNN has an activation per
        # linear).
        bias = b_ref[layer:layer + 1, :out_pads[layer]].astype(jnp.float32)
        acc = jnp.maximum(acc + bias, 0.0)
        h = acc if layer == n_layers - 1 else acc.astype(x_ref.dtype)
    o_ref[...] = h.astype(o_ref.dtype)


def fused_mlp_pallas(x, padded_weights, padded_biases, bias_packed, out_pads,
                     out_dim):
    """Run the full stacked Linear+ReLU MLP as ONE pallas_call (weights
    resident in VMEM). Falls back to per-layer weight streaming when the stack
    does not fit the per-core VMEM budget."""
    n_layers = len(padded_weights)
    B, Din = x.shape
    Din_pad = padded_weights[0].shape[0]
    Dout_pad = padded_weights[-1].shape[1]
    compute_dtype = x.dtype
    itemsize = jnp.dtype(compute_dtype).itemsize
    p_item = jnp.dtype(padded_weights[0].dtype).itemsize

    vmem_phys, num_cores = _tpu_generation_info()
    budget = (vmem_phys * 4) // 5            # ~102 MiB v5e/v6e, ~51 MiB v7x
    phys_cap = vmem_phys - (8 << 20)
    headroom = 4 << 20

    weight_bytes = sum(int(w.size) for w in padded_weights) * p_item
    bias_bytes = int(bias_packed.size) * p_item
    param_bytes = weight_bytes + bias_bytes
    widest = max(Din_pad, max(w.shape[1] for w in padded_weights))

    # Activation-VMEM cost per batch row (params single-buffered): pipelined x
    # blocks + double-buffered output + two live f32 intermediates + one live
    # compute-dtype intermediate.
    x_buffers = 3 if num_cores >= 2 else 2   # deeper x pipeline only on v7x
    per_row = ((x_buffers * Din_pad + 2 * Dout_pad) * itemsize
               + 2 * widest * 4 + widest * itemsize)

    if param_bytes + headroom + _SUBLANE * per_row > budget:
        # All-resident design exceeds this generation's per-core VMEM budget:
        # degrade gracefully to per-layer weight streaming.
        return streaming_mlp_pallas(x, padded_weights, padded_biases, out_dim,
                                    vmem_phys=vmem_phys)

    # ---- batch tile: as large as the budget allows (amortizes the ~600-cycle
    # per-grid-step overhead), sublane aligned, capped at 1024 rows ----
    act_budget = budget - param_bytes - headroom
    tb_cap = max(_SUBLANE, min(1024, act_budget // per_row))
    tb_cap = (tb_cap // _SUBLANE) * _SUBLANE
    B_sub = _round_up(B, _SUBLANE)
    if num_cores >= 2 and B_sub >= 2 * _SUBLANE:
        # v7x megacore: ensure >=2 batch blocks so the 2nd TensorCore works.
        tb = min(tb_cap, _round_up(pl.cdiv(B_sub, 2), _SUBLANE))
    else:
        # single TensorCore: the grid is a serial loop -- no forced split.
        tb = min(tb_cap, B_sub)
    B_pad = _round_up(B, tb)
    grid = (B_pad // tb,)
    if grid[0] < 3:
        x_buffers = 2                        # 3rd x buffer useless with <3 steps

    # ---- pad activations only when needed (zeros are inert through x@W+b,
    # ReLU); when B is sublane-aligned and fits one tile there is no copy ----
    if (B_pad, Din_pad) != (B, Din):
        x_p = jnp.pad(x, ((0, B_pad - B), (0, Din_pad - Din)))
    else:
        x_p = x

    flops = sum(2 * B_pad * w.shape[0] * w.shape[1] for w in padded_weights)
    bytes_accessed = (int(x_p.size) * itemsize + param_bytes
                      + B_pad * Dout_pad * itemsize)
    cost = pl.CostEstimate(flops=int(flops), transcendentals=0,
                           bytes_accessed=int(bytes_accessed))

    def run(single_buffer_params, xbuf):
        def const_spec(shape):
            imap = lambda i, _shape=shape: (0,) * len(_shape)
            if single_buffer_params:
                # Resident operand: constant index_map, nothing to pipeline.
                return pl.BlockSpec(shape, imap, pipeline_mode=pl.Buffered(1))
            return pl.BlockSpec(shape, imap)

        if xbuf != 2:
            x_spec = pl.BlockSpec((tb, Din_pad), lambda i: (i, 0),
                                  pipeline_mode=pl.Buffered(xbuf))
        else:
            x_spec = pl.BlockSpec((tb, Din_pad), lambda i: (i, 0))

        in_specs = ([x_spec]
                    + [const_spec(w.shape) for w in padded_weights]
                    + [const_spec(bias_packed.shape)])
        out_specs = pl.BlockSpec((tb, Dout_pad), lambda i: (i, 0))

        pfac = 1 if single_buffer_params else 2
        required = (pfac * param_bytes
                    + xbuf * tb * Din_pad * itemsize
                    + 2 * tb * Dout_pad * itemsize
                    + 2 * tb * widest * 4 + tb * widest * itemsize
                    + headroom)
        vmem_limit = int(min(max(required, 16 << 20), phys_cap))

        return pl.pallas_call(
            functools.partial(_fused_mlp_kernel, n_layers=n_layers,
                              out_pads=tuple(out_pads)),
            out_shape=jax.ShapeDtypeStruct((B_pad, Dout_pad), compute_dtype),
            grid_spec=pltpu.PrefetchScalarGridSpec(
                num_scalar_prefetch=0,
                grid=grid,
                in_specs=in_specs,
                out_specs=out_specs,
            ),
            compiler_params=pltpu.CompilerParams(
                dimension_semantics=("parallel",),
                vmem_limit_bytes=vmem_limit,
            ),
            cost_estimate=cost,
        )(x_p, *padded_weights, bias_packed)

    try:
        out_p = run(True, x_buffers)
    except Exception:
        # Conservative retry if pipeline_mode=pl.Buffered is rejected by the
        # installed jax/Mosaic: plain (double-buffered) specs, 2x param VMEM.
        out_p = run(False, 2)

    return out_p[:B, :out_dim]


# ----------------------------------------------------------------------------
# Streaming fallback path (per-layer K-tiled matmul + bias + ReLU)
# ----------------------------------------------------------------------------
def _layer_kernel(x_ref, w_ref, b_ref, o_ref, acc_ref):
    @pl.when(pl.program_id(2) == 0)
    def _():
        acc_ref[...] = jnp.zeros_like(acc_ref)

    acc_ref[...] += jnp.dot(x_ref[...].astype(w_ref.dtype), w_ref[...],
                            preferred_element_type=jnp.float32)

    @pl.when(pl.program_id(2) == pl.num_programs(2) - 1)
    def _():
        o_ref[...] = jnp.maximum(
            acc_ref[...] + b_ref[...].astype(jnp.float32), 0.0
        ).astype(o_ref.dtype)


def streaming_mlp_pallas(x, padded_weights, padded_biases, out_dim,
                         vmem_phys=None):
    """Fallback: one pallas_call per layer, weights streamed block-by-block
    (never required to be fully VMEM-resident). Used automatically when the
    fused all-resident design exceeds the per-core VMEM budget."""
    if vmem_phys is None:
        vmem_phys, _ = _tpu_generation_info()
    phys_cap = vmem_phys - (8 << 20)
    B, Din = x.shape
    compute_dtype = x.dtype
    c_item = jnp.dtype(compute_dtype).itemsize
    Din_pad = padded_weights[0].shape[0]

    tm = min(256, _round_up(B, _SUBLANE))
    B_pad = _round_up(B, tm)
    if (B_pad, Din_pad) != (B, Din):
        h = jnp.pad(x, ((0, B_pad - B), (0, Din_pad - Din)))
    else:
        h = x

    for w, b in zip(padded_weights, padded_biases):
        Kp, Np = w.shape
        p_item = jnp.dtype(w.dtype).itemsize
        tk = _divisor_tile(Kp, _LANE, 512)
        tn = _divisor_tile(Np, _LANE, 512)
        grid = (B_pad // tm, Np // tn, Kp // tk)
        vmem_limit = int(min(max(
            2 * (tm * tk * c_item + tk * tn * p_item + _SUBLANE * tn * p_item
                 + tm * tn * c_item) + tm * tn * 4 + (4 << 20),
            16 << 20), phys_cap))
        h = pl.pallas_call(
            _layer_kernel,
            out_shape=jax.ShapeDtypeStruct((B_pad, Np), compute_dtype),
            grid_spec=pltpu.PrefetchScalarGridSpec(
                num_scalar_prefetch=0,
                grid=grid,
                in_specs=[
                    pl.BlockSpec((tm, tk), lambda i, j, k: (i, k)),
                    pl.BlockSpec((tk, tn), lambda i, j, k: (k, j)),
                    pl.BlockSpec((1, tn), lambda i, j, k: (0, j)),
                ],
                out_specs=pl.BlockSpec((tm, tn), lambda i, j, k: (i, j)),
                scratch_shapes=[pltpu.VMEM((tm, tn), jnp.float32)],
            ),
            compiler_params=pltpu.CompilerParams(
                dimension_semantics=("parallel", "parallel", "arbitrary"),
                vmem_limit_bytes=vmem_limit,
            ),
        )(h, w, b)
    return h[:B, :out_dim]


# ----------------------------------------------------------------------------
# Module mirror
# ----------------------------------------------------------------------------
class DNNPallas:
    """Mirror of the PyTorch DNN module (activation='relu', use_bn=False,
    dropout inactive at inference). Weights ~ N(0, init_std); biases mirror
    nn.Linear's default U(-1/sqrt(fan_in), 1/sqrt(fan_in)) init (different RNG
    than torch, so values won't bitwise-match a torch checkpoint).

    param_dtype=jnp.bfloat16 keeps resident params in bf16 (MXU runs at bf16
    rate, half the weight HBM/VMEM traffic) while accumulating in f32."""

    def __init__(self, inputs_dim, hidden_units, init_std=1e-4, seed=0,
                 dtype=jnp.float32, param_dtype=None):
        if len(hidden_units) == 0:
            raise ValueError("hidden_units is empty!!")
        if param_dtype is None:
            param_dtype = dtype
        dims = [inputs_dim] + list(hidden_units)
        key = jax.random.PRNGKey(seed)
        self.dtype = dtype
        self.param_dtype = param_dtype
        self.out_dim = dims[-1]
        self.weights = []    # unpadded (in, out) -- reference layout
        self.biases = []     # unpadded (out,)
        self.weights_p = []  # lane-padded (in_pad, out_pad) for the kernel
        self.biases_p = []   # (1, out_pad) per layer (streaming fallback)
        out_pads = []
        for i in range(len(dims) - 1):
            fan_in, fan_out = dims[i], dims[i + 1]
            key, wk, bk = jax.random.split(key, 3)
            w = (init_std * jax.random.normal(
                wk, (fan_in, fan_out), dtype=jnp.float32)).astype(param_dtype)
            bound = 1.0 / math.sqrt(fan_in)
            b = jax.random.uniform(
                bk, (fan_out,), minval=-bound, maxval=bound,
                dtype=jnp.float32).astype(param_dtype)
            self.weights.append(w)
            self.biases.append(b)
            in_pad = _round_up(fan_in, _LANE)
            out_pad = _round_up(fan_out, _LANE)
            out_pads.append(out_pad)
            w_p = jnp.zeros((in_pad, out_pad),
                            dtype=param_dtype).at[:fan_in, :fan_out].set(w)
            b_p = jnp.zeros((1, out_pad),
                            dtype=param_dtype).at[0, :fan_out].set(b)
            self.weights_p.append(w_p)
            self.biases_p.append(b_p)
        self.out_pads = tuple(out_pads)
        # Pack all biases into ONE resident operand (one DMA descriptor, one
        # VMEM tile group) instead of one (1, out_pad) operand per layer.
        max_out_pad = max(out_pads)
        bias_packed = jnp.zeros((len(self.biases), max_out_pad),
                                dtype=param_dtype)
        for i, b in enumerate(self.biases):
            bias_packed = bias_packed.at[i, :b.shape[0]].set(b)
        self.bias_packed = bias_packed

    def __call__(self, inputs):
        # supports nD input (batch, ..., input_dim) like the PyTorch module
        orig_shape = inputs.shape
        x = inputs.reshape(-1, orig_shape[-1]).astype(self.dtype)
        out = fused_mlp_pallas(x, self.weights_p, self.biases_p,
                               self.bias_packed, self.out_pads, self.out_dim)
        # TODO(synk): train-mode dropout and use_bn=True (BatchNorm) are not
        # implemented; both are identity / absent in this inference config.
        return out.reshape(*orig_shape[:-1], self.out_dim)


def _reference(inputs, weights, biases, compute_dtype=jnp.float32):
    """Pure-JAX mirror of the kernel math: per-layer cast to the param dtype,
    f32 accumulation, bias+ReLU, cast back to the activation dtype."""
    x = inputs.reshape(-1, inputs.shape[-1]).astype(compute_dtype)
    for w, b in zip(weights, biases):
        acc = jnp.dot(x.astype(w.dtype), w,
                      preferred_element_type=jnp.float32)
        acc = jnp.maximum(acc + b.astype(jnp.float32), 0.0)
        x = acc.astype(compute_dtype)
    return x.reshape(*inputs.shape[:-1], x.shape[-1])


if __name__ == "__main__":
    batch = 8
    inputs_dim = 32
    hidden_units = (64, 32, 16)

    key = jax.random.PRNGKey(0)
    x = jax.random.normal(key, (batch, inputs_dim), dtype=jnp.float32)

    # larger init_std than the module default so the correctness check is
    # numerically meaningful (module default 1e-4 makes outputs ~1e-12).
    model = DNNPallas(inputs_dim, hidden_units, init_std=0.1, seed=0)
    out = jax.block_until_ready(model(x))

    ref = _reference(x, model.weights, model.biases)
    assert out.shape == (batch, hidden_units[-1])
    assert out.dtype == x.dtype
    assert jnp.allclose(out, ref, atol=1e-5, rtol=1e-4), float(
        jnp.max(jnp.abs(out - ref)))

    # bf16 resident params (MXU at bf16 rate, half the weight VMEM/HBM).
    model_bf16 = DNNPallas(inputs_dim, hidden_units, init_std=0.1, seed=0,
                           param_dtype=jnp.bfloat16)
    out_bf = jax.block_until_ready(model_bf16(x))
    ref_bf = _reference(x, model_bf16.weights, model_bf16.biases)
    assert out_bf.shape == (batch, hidden_units[-1])
    assert jnp.allclose(out_bf, ref_bf, atol=1e-2, rtol=1e-2), float(
        jnp.max(jnp.abs(out_bf - ref_bf)))

    # Weight-streaming fallback path (selected automatically when the stack
    # does not fit per-core VMEM); exercised explicitly here for coverage.
    out_stream = jax.block_until_ready(
        streaming_mlp_pallas(x, model.weights_p, model.biases_p,
                             model.out_dim))
    assert out_stream.shape == (batch, hidden_units[-1])
    assert jnp.allclose(out_stream, ref, atol=1e-5, rtol=1e-4), float(
        jnp.max(jnp.abs(out_stream - ref)))

    print("KERNEL_OK")
</pallas_src>

<mosaic_0001>
module attributes {stable_mosaic.version = 11 : i64} {
  func.func @_fused_mlp_kernel(%arg0: i32, %arg1: memref<8x128xf32, #tpu.memory_space<vmem>>, %arg2: memref<128x128xf32, #tpu.memory_space<vmem>>, %arg3: memref<128x128xf32, #tpu.memory_space<vmem>>, %arg4: memref<128x128xf32, #tpu.memory_space<vmem>>, %arg5: memref<3x128xf32, #tpu.memory_space<vmem>>, %arg6: memref<8x128xf32, #tpu.memory_space<vmem>>) attributes {dimension_semantics = [#tpu.dimension_semantics<parallel>], iteration_bounds = array<i64: 1>, scalar_prefetch = 0 : i64, scratch_operands = 0 : i64, tpu.core_type = #tpu.core_type<tc>, window_params = [{transform_indices = @transform_0, window_bounds = array<i64: 8, 128>}, {pipeline_mode = #tpu.pipeline_mode<synchronous>, transform_indices = @transform_1, window_bounds = array<i64: 128, 128>}, {pipeline_mode = #tpu.pipeline_mode<synchronous>, transform_indices = @transform_2, window_bounds = array<i64: 128, 128>}, {pipeline_mode = #tpu.pipeline_mode<synchronous>, transform_indices = @transform_3, window_bounds = array<i64: 128, 128>}, {pipeline_mode = #tpu.pipeline_mode<synchronous>, transform_indices = @transform_4, window_bounds = array<i64: 3, 128>}, {transform_indices = @transform_5, window_bounds = array<i64: 8, 128>}]} {
    %c0 = arith.constant 0 : index
    %c0_0 = arith.constant 0 : index
    %0 = vector.load %arg1[%c0, %c0_0] : memref<8x128xf32, #tpu.memory_space<vmem>>, vector<8x128xf32>
    %c0_1 = arith.constant 0 : index
    %c0_2 = arith.constant 0 : index
    %1 = vector.load %arg2[%c0_1, %c0_2] : memref<128x128xf32, #tpu.memory_space<vmem>>, vector<128x128xf32>
    %cst = arith.constant dense<0.000000e+00> : vector<8x128xf32>
    %2 = tpu.matmul %0, %1, %cst {dimension_numbers = #tpu.dot_dimension_numbers<[1], [0], [0], [1], [0, 0, 1, 1], [], []>} : vector<8x128xf32>, vector<128x128xf32>, vector<8x128xf32> -> vector<8x128xf32>
    %c0_3 = arith.constant 0 : index
    %c0_4 = arith.constant 0 : index
    %3 = vector.load %arg5[%c0_3, %c0_4] : memref<3x128xf32, #tpu.memory_space<vmem>>, vector<1x128xf32>
    %4 = vector.broadcast %3 : vector<1x128xf32> to vector<8x128xf32>
    %5 = arith.addf %2, %4 : vector<8x128xf32>
    %cst_5 = arith.constant 0.000000e+00 : f32
    %6 = vector.broadcast %cst_5 : f32 to vector<8x128xf32>
    %7 = arith.maximumf %5, %6 : vector<8x128xf32>
    %c0_6 = arith.constant 0 : index
    %c0_7 = arith.constant 0 : index
    %8 = vector.load %arg3[%c0_6, %c0_7] : memref<128x128xf32, #tpu.memory_space<vmem>>, vector<128x128xf32>
    %cst_8 = arith.constant dense<0.000000e+00> : vector<8x128xf32>
    %9 = tpu.matmul %7, %8, %cst_8 {dimension_numbers = #tpu.dot_dimension_numbers<[1], [0], [0], [1], [0, 0, 1, 1], [], []>} : vector<8x128xf32>, vector<128x128xf32>, vector<8x128xf32> -> vector<8x128xf32>
    %c1 = arith.constant 1 : index
    %c0_9 = arith.constant 0 : index
    %10 = vector.load %arg5[%c1, %c0_9] : memref<3x128xf32, #tpu.memory_space<vmem>>, vector<1x128xf32>
    %11 = vector.broadcast %10 : vector<1x128xf32> to vector<8x128xf32>
    %12 = arith.addf %9, %11 : vector<8x128xf32>
    %cst_10 = arith.constant 0.000000e+00 : f32
    %13 = vector.broadcast %cst_10 : f32 to vector<8x128xf32>
    %14 = arith.maximumf %12, %13 : vector<8x128xf32>
    %c0_11 = arith.constant 0 : index
    %c0_12 = arith.constant 0 : index
    %15 = vector.load %arg4[%c0_11, %c0_12] : memref<128x128xf32, #tpu.memory_space<vmem>>, vector<128x128xf32>
    %cst_13 = arith.constant dense<0.000000e+00> : vector<8x128xf32>
    %16 = tpu.matmul %14, %15, %cst_13 {dimension_numbers = #tpu.dot_dimension_numbers<[1], [0], [0], [1], [0, 0, 1, 1], [], []>} : vector<8x128xf32>, vector<128x128xf32>, vector<8x128xf32> -> vector<8x128xf32>
    %c2 = arith.constant 2 : index
    %c0_14 = arith.constant 0 : index
    %17 = vector.load %arg5[%c2, %c0_14] : memref<3x128xf32, #tpu.memory_space<vmem>>, vector<1x128xf32>
    %18 = vector.broadcast %17 : vector<1x128xf32> to vector<8x128xf32>
    %19 = arith.addf %16, %18 : vector<8x128xf32>
    %cst_15 = arith.constant 0.000000e+00 : f32
    %20 = vector.broadcast %cst_15 : f32 to vector<8x128xf32>
    %21 = arith.maximumf %19, %20 : vector<8x128xf32>
    %c0_16 = arith.constant 0 : index
    %c0_17 = arith.constant 0 : index
    %22 = vector.load %arg6[%c0_16, %c0_17] : memref<8x128xf32, #tpu.memory_space<vmem>>, vector<8x128xf32>
    tpu.vector_store %arg6[%c0_16, %c0_17], %21 {strides = array<i32>} : memref<8x128xf32, #tpu.memory_space<vmem>>, vector<8x128xf32>,
    return
  }
  func.func @transform_0(%arg0: i32) -> (i32, i32) {
    %c0_i32 = arith.constant 0 : i32
    %c0_i32_0 = arith.constant 0 : i32
    return %arg0, %c0_i32 : i32, i32
  }
  func.func @transform_1(%arg0: i32) -> (i32, i32) {
    %c0_i32 = arith.constant 0 : i32
    %c0_i32_0 = arith.constant 0 : i32
    %c0_i32_1 = arith.constant 0 : i32
    return %c0_i32, %c0_i32_0 : i32, i32
  }
  func.func @transform_2(%arg0: i32) -> (i32, i32) {
    %c0_i32 = arith.constant 0 : i32
    %c0_i32_0 = arith.constant 0 : i32
    %c0_i32_1 = arith.constant 0 : i32
    return %c0_i32, %c0_i32_0 : i32, i32
  }
  func.func @transform_3(%arg0: i32) -> (i32, i32) {
    %c0_i32 = arith.constant 0 : i32
    %c0_i32_0 = arith.constant 0 : i32
    %c0_i32_1 = arith.constant 0 : i32
    return %c0_i32, %c0_i32_0 : i32, i32
  }
  func.func @transform_4(%arg0: i32) -> (i32, i32) {
    %c0_i32 = arith.constant 0 : i32
    %c0_i32_0 = arith.constant 0 : i32
    %c0_i32_1 = arith.constant 0 : i32
    return %c0_i32, %c0_i32_0 : i32, i32
  }
  func.func @transform_5(%arg0: i32) -> (i32, i32) {
    %c0_i32 = arith.constant 0 : i32
    %c0_i32_0 = arith.constant 0 : i32
    return %arg0, %c0_i32 : i32, i32
  }
}

module attributes {stable_mosaic.version = 11 : i64} {
  func.func @_fused_mlp_kernel(%arg0: i32, %arg1: memref<8x128xf32, #tpu.memory_space<vmem>>, %arg2: memref<128x128xf32, #tpu.memory_space<vmem>>, %arg3: memref<128x128xf32, #tpu.memory_space<vmem>>, %arg4: memref<128x128xf32, #tpu.memory_space<vmem>>, %arg5: memref<3x128xf32, #tpu.memory_space<vmem>>, %arg6: memref<8x128xf32, #tpu.memory_space<vmem>>) attributes {dimension_semantics = [#tpu.dimension_semantics<parallel>], iteration_bounds = array<i64: 1>, scalar_prefetch = 0 : i64, scratch_operands = 0 : i64, tpu.core_type = #tpu.core_type<tc>, window_params = [{transform_indices = @transform_0, window_bounds = array<i64: 8, 128>}, {pipeline_mode = #tpu.pipeline_mode<synchronous>, transform_indices = @transform_1, window_bounds = array<i64: 128, 128>}, {pipeline_mode = #tpu.pipeline_mode<synchronous>, transform_indices = @transform_2, window_bounds = array<i64: 128, 128>}, {pipeline_mode = #tpu.pipeline_mode<synchronous>, transform_indices = @transform_3, window_bounds = array<i64: 128, 128>}, {pipeline_mode = #tpu.pipeline_mode<synchronous>, transform_indices = @transform_4, window_bounds = array<i64: 3, 128>}, {transform_indices = @transform_5, window_bounds = array<i64: 8, 128>}]} {
    %c0 = arith.constant 0 : index
    %c0_0 = arith.constant 0 : index
    %0 = vector.load %arg1[%c0, %c0_0] : memref<8x128xf32, #tpu.memory_space<vmem>>, vector<8x128xf32>
    %c0_1 = arith.constant 0 : index
    %c0_2 = arith.constant 0 : index
    %1 = vector.load %arg2[%c0_1, %c0_2] : memref<128x128xf32, #tpu.memory_space<vmem>>, vector<128x128xf32>
    %cst = arith.constant dense<0.000000e+00> : vector<8x128xf32>
    %2 = tpu.matmul %0, %1, %cst {dimension_numbers = #tpu.dot_dimension_numbers<[1], [0], [0], [1], [0, 0, 1, 1], [], []>} : vector<8x128xf32>, vector<128x128xf32>, vector<8x128xf32> -> vector<8x128xf32>
    %c0_3 = arith.constant 0 : index
    %c0_4 = arith.constant 0 : index
    %3 = vector.load %arg5[%c0_3, %c0_4] : memref<3x128xf32, #tpu.memory_space<vmem>>, vector<1x128xf32>
    %4 = vector.broadcast %3 : vector<1x128xf32> to vector<8x128xf32>
    %5 = arith.addf %2, %4 : vector<8x128xf32>
    %cst_5 = arith.constant 0.000000e+00 : f32
    %6 = vector.broadcast %cst_5 : f32 to vector<8x128xf32>
    %7 = arith.maximumf %5, %6 : vector<8x128xf32>
    %c0_6 = arith.constant 0 : index
    %c0_7 = arith.constant 0 : index
    %8 = vector.load %arg3[%c0_6, %c0_7] : memref<128x128xf32, #tpu.memory_space<vmem>>, vector<128x128xf32>
    %cst_8 = arith.constant dense<0.000000e+00> : vector<8x128xf32>
    %9 = tpu.matmul %7, %8, %cst_8 {dimension_numbers = #tpu.dot_dimension_numbers<[1], [0], [0], [1], [0, 0, 1, 1], [], []>} : vector<8x128xf32>, vector<128x128xf32>, vector<8x128xf32> -> vector<8x128xf32>
    %c1 = arith.constant 1 : index
    %c0_9 = arith.constant 0 : index
    %10 = vector.load %arg5[%c1, %c0_9] : memref<3x128xf32, #tpu.memory_space<vmem>>, vector<1x128xf32>
    %11 = vector.broadcast %10 : vector<1x128xf32> to vector<8x128xf32>
    %12 = arith.addf %9, %11 : vector<8x128xf32>
    %cst_10 = arith.constant 0.000000e+00 : f32
    %13 = vector.broadcast %cst_10 : f32 to vector<8x128xf32>
    %14 = arith.maximumf %12, %13 : vector<8x128xf32>
    %c0_11 = arith.constant 0 : index
    %c0_12 = arith.constant 0 : index
    %15 = vector.load %arg4[%c0_11, %c0_12] : memref<128x128xf32, #tpu.memory_space<vmem>>, vector<128x128xf32>
    %cst_13 = arith.constant dense<0.000000e+00> : vector<8x128xf32>
    %16 = tpu.matmul %14, %15, %cst_13 {dimension_numbers = #tpu.dot_dimension_numbers<[1], [0], [0], [1], [0, 0, 1, 1], [], []>} : vector<8x128xf32>, vector<128x128xf32>, vector<8x128xf32> -> vector<8x128xf32>
    %c2 = arith.constant 2 : index
    %c0_14 = arith.constant 0 : index
    %17 = vector.load %arg5[%c2, %c0_14] : memref<3x128xf32, #tpu.memory_space<vmem>>, vector<1x128xf32>
    %18 = vector.broadcast %17 : vector<1x128xf32> to vector<8x128xf32>
    %19 = arith.addf %16, %18 : vector<8x128xf32>
    %cst_15 = arith.constant 0.000000e+00 : f32
    %20 = vector.broadcast %cst_15 : f32 to vector<8x128xf32>
    %21 = arith.maximumf %19, %20 : vector<8x128xf32>
    %c0_16 = arith.constant 0 : index
    %c0_17 = arith.constant 0 : index
    %22 = vector.load %arg6[%c0_16, %c0_17] : memref<8x128xf32, #tpu.memory_space<vmem>>, vector<8x128xf32>
    tpu.vector_store %arg6[%c0_16, %c0_17], %21 {strides = array<i32>} : memref<8x128xf32, #tpu.memory_space<vmem>>, vector<8x128xf32>,
    return
  }
  func.func @transform_0(%arg0: i32) -> (i32, i32) {
    %c0_i32 = arith.constant 0 : i32
    %c0_i32_0 = arith.constant 0 : i32
    return %arg0, %c0_i32 : i32, i32
  }
  func.func @transform_1(%arg0: i32) -> (i32, i32) {
    %c0_i32 = arith.constant 0 : i32
    %c0_i32_0 = arith.constant 0 : i32
    %c0_i32_1 = arith.constant 0 : i32
    return %c0_i32, %c0_i32_0 : i32, i32
  }
  func.func @transform_2(%arg0: i32) -> (i32, i32) {
    %c0_i32 = arith.constant 0 : i32
    %c0_i32_0 = arith.constant 0 : i32
    %c0_i32_1 = arith.constant 0 : i32
    return %c0_i32, %c0_i32_0 : i32, i32
  }
  func.func @transform_3(%arg0: i32) -> (i32, i32) {
    %c0_i32 = arith.constant 0 : i32
    %c0_i32_0 = arith.constant 0 : i32
    %c0_i32_1 = arith.constant 0 : i32
    return %c0_i32, %c0_i32_0 : i32, i32
  }
  func.func @transform_4(%arg0: i32) -> (i32, i32) {
    %c0_i32 = arith.constant 0 : i32
    %c0_i32_0 = arith.constant 0 : i32
    %c0_i32_1 = arith.constant 0 : i32
    return %c0_i32, %c0_i32_0 : i32, i32
  }
  func.func @transform_5(%arg0: i32) -> (i32, i32) {
    %c0_i32 = arith.constant 0 : i32
    %c0_i32_0 = arith.constant 0 : i32
    return %arg0, %c0_i32 : i32, i32
  }
}

</mosaic_0001>

<llo_original>
// kernel: tpu_custom_call.1
$region0: #{tpu_custom_call.1}
  #allocation0 [shape = 'u32[]', space=smem, size = 0x4, offset = 0x4, fixed_abs, tag = 'smem constant byte address 0x4 - core index']
  #allocation1 [shape = 'u32[144,128]{1,0:T(1,128)}', space=vmem, size = 0x12000, scoped, tag = 'internal scratch']
  %s0 = inlined_call_operand.hbm [shape: f32[8,128], index: 0, kind: input, shape index: {}]
  %s1 = inlined_call_operand.hbm [shape: f32[128,128], index: 1, kind: input, shape index: {}]
  %s2 = inlined_call_operand.hbm [shape: f32[128,128], index: 2, kind: input, shape index: {}]
  %s3 = inlined_call_operand.hbm [shape: f32[128,128], index: 3, kind: input, shape index: {}]
  %s4 = inlined_call_operand.vmem [shape: f32[3,128], index: 4, kind: input, shape index: {}]
  %s5 = inlined_call_operand.hbm [shape: f32[8,128], index: 5, kind: output, shape index: {}]
  %s6 = sld [smem:[#allocation0]]
  $region46: #{tpu_custom_call.1} parent=0
    _
  %s8 = ssub.s32 1, %s6
  %s9 = scalar_select 0, %s8, %s6
  $region1: #{tpu_custom_call.1} parent=0
    #allocation2 [shape = 'u8[4096]{0}', space=vmem, size = 0x1000, scoped, tag = 'input window, operand 0, single buffered']
    #allocation3 [shape = 's32[1]{0}', space=sflag, size = 0x4, scoped, tag = 'scoped memory for tpu_custom_call.1']
    #allocation4 [shape = 's32[1]{0}', space=sflag, size = 0x4, scoped, tag = 'scoped memory for tpu_custom_call.1']
    #allocation5 [shape = 'u8[65536]{0}', space=vmem, size = 0x10000, scoped, tag = 'input window, operand 1, single buffered']
    #allocation6 [shape = 's32[1]{0}', space=sflag, size = 0x4, scoped, tag = 'scoped memory for tpu_custom_call.1']
    #allocation7 [shape = 'u8[65536]{0}', space=vmem, size = 0x10000, scoped, tag = 'input window, operand 2, single buffered']
    #allocation8 [shape = 'u8[65536]{0}', space=vmem, size = 0x10000, scoped, tag = 'input window, operand 3, single buffered']
    #allocation9 [shape = 's32[1]{0}', space=sflag, size = 0x4, scoped, tag = 'scoped memory for tpu_custom_call.1']
    #allocation10 [shape = 'u8[4096]{0}', space=vmem, size = 0x1000, scoped, tag = 'output window, operand 0, single buffered']
    %10 = vsyncpa [#allocation3], 0
    %11 = vsyncpa [#allocation6], 0
    %12 = vsyncpa [#allocation9], 0
    %13 = vsyncpa [#allocation4], 0
    // Predicated region
    $region2: #{tpu_custom_call.1} parent=1 // pred_check
      _
    $region3: #{tpu_custom_call.1} parent=1 // pred_check_branch
      %15 = sbr.rel (0) target = $region5
    $region4: #{tpu_custom_call.1} parent=1 // pred_region
      %s17 = ssub.s32 128, 128
      %18 = vsyncadd [#allocation3], %s17
      %s20 = sshll.u32 [#allocation2], 4
      %s21 = int_to_ptr.vmem [resolvable:$true] %s20
      %23 = dma.hbm_to_vmem [thread:$0]  %s0, 128, %s21, [#allocation3]
    $region5: #{tpu_custom_call.1} parent=1 // pred_fallthru
      _
    // Predicated region
    $region6: #{tpu_custom_call.1} parent=1 // pred_check
      _
    $region7: #{tpu_custom_call.1} parent=1 // pred_check_branch
      %25 = sbr.rel (0) target = $region9
    $region8: #{tpu_custom_call.1} parent=1 // pred_region
      %s27 = ssub.s32 2048, 2048
      %28 = vsyncadd [#allocation6], %s27
      %s29 = sshll.u32 [#allocation5], 4
      %s30 = int_to_ptr.vmem [resolvable:$true] %s29
      %35 = dma.hbm_to_vmem [thread:$0]  %s1, 2048, %s30, [#allocation6], 128, 128, 8
    $region9: #{tpu_custom_call.1} parent=1 // pred_fallthru
      _
    // Predicated region
    $region10: #{tpu_custom_call.1} parent=1 // pred_check
      _
    $region11: #{tpu_custom_call.1} parent=1 // pred_check_branch
      %37 = sbr.rel (0) target = $region13
    $region12: #{tpu_custom_call.1} parent=1 // pred_region
      %s39 = ssub.s32 2048, 2048
      %40 = vsyncadd [#allocation6], %s39
      %s41 = sshll.u32 [#allocation7], 4
      %s42 = int_to_ptr.vmem [resolvable:$true] %s41
      %47 = dma.hbm_to_vmem [thread:$0]  %s2, 2048, %s42, [#allocation6], 128, 128, 8
    $region13: #{tpu_custom_call.1} parent=1 // pred_fallthru
      _
    // Predicated region
    $region14: #{tpu_custom_call.1} parent=1 // pred_check
      _
    $region15: #{tpu_custom_call.1} parent=1 // pred_check_branch
      %49 = sbr.rel (0) target = $region17
    $region16: #{tpu_custom_call.1} parent=1 // pred_region
      %s51 = ssub.s32 2048, 2048
      %52 = vsyncadd [#allocation9], %s51
      %s53 = sshll.u32 [#allocation8], 4
      %s54 = int_to_ptr.vmem [resolvable:$true] %s53
      %59 = dma.hbm_to_vmem [thread:$0]  %s3, 2048, %s54, [#allocation9], 128, 128, 8
    $region17: #{tpu_custom_call.1} parent=1 // pred_fallthru
      _
    // Predicated region
    $region18: #{tpu_custom_call.1} parent=1 // pred_check
      _
    $region19: #{tpu_custom_call.1} parent=1 // pred_check_branch
      %61 = sbr.rel (0) target = $region21
    $region20: #{tpu_custom_call.1} parent=1 // pred_region
      _
    $region21: #{tpu_custom_call.1} parent=1 // pred_fallthru
      _
    // Predicated region
    $region22: #{tpu_custom_call.1} parent=1 // pred_check
      _
    $region23: #{tpu_custom_call.1} parent=1 // pred_check_branch
      %63 = sbr.rel (0) target = $region25
    $region24: #{tpu_custom_call.1} parent=1 // pred_region
      %64 = dma.done [#allocation3], 128
    $region25: #{tpu_custom_call.1} parent=1 // pred_fallthru
      _
    // Predicated region
    $region26: #{tpu_custom_call.1} parent=1 // pred_check
      _
    $region27: #{tpu_custom_call.1} parent=1 // pred_check_branch
      %66 = sbr.rel (0) target = $region29
    $region28: #{tpu_custom_call.1} parent=1 // pred_region
      %67 = dma.done [#allocation6], 2048
    $region29: #{tpu_custom_call.1} parent=1 // pred_fallthru
      _
    // Predicated region
    $region30: #{tpu_custom_call.1} parent=1 // pred_check
      _
    $region31: #{tpu_custom_call.1} parent=1 // pred_check_branch
      %69 = sbr.rel (0) target = $region33
    $region32: #{tpu_custom_call.1} parent=1 // pred_region
      %70 = dma.done [#allocation6], 2048
    $region33: #{tpu_custom_call.1} parent=1 // pred_fallthru
      _
    // Predicated region
    $region34: #{tpu_custom_call.1} parent=1 // pred_check
      _
    $region35: #{tpu_custom_call.1} parent=1 // pred_check_branch
      %72 = sbr.rel (0) target = $region37
    $region36: #{tpu_custom_call.1} parent=1 // pred_region
      %73 = dma.done [#allocation9], 2048
    $region37: #{tpu_custom_call.1} parent=1 // pred_fallthru
      _
    %v74 = vld [vmem:[#allocation2] sm:$0xff]
    %v75 = vld [vmem:[#allocation5] sm:$0xff]
    %v76 = vld [vmem:[#allocation5 + $0x8] sm:$0xff]
    %v77 = vld [vmem:[#allocation5 + $0x10] sm:$0xff]
    %v78 = vld [vmem:[#allocation5 + $0x18] sm:$0xff]
    %v79 = vld [vmem:[#allocation5 + $0x20] sm:$0xff]
    %v80 = vld [vmem:[#allocation5 + $0x28] sm:$0xff]
    %v81 = vld [vmem:[#allocation5 + $0x30] sm:$0xff]
    %v82 = vld [vmem:[#allocation5 + $0x38] sm:$0xff]
    %v83 = vld [vmem:[#allocation5 + $0x40] sm:$0xff]
    %v84 = vld [vmem:[#allocation5 + $0x48] sm:$0xff]
    %v85 = vld [vmem:[#allocation5 + $0x50] sm:$0xff]
    %v86 = vld [vmem:[#allocation5 + $0x58] sm:$0xff]
    %v87 = vld [vmem:[#allocation5 + $0x60] sm:$0xff]
    %v88 = vld [vmem:[#allocation5 + $0x68] sm:$0xff]
    %v89 = vld [vmem:[#allocation5 + $0x70] sm:$0xff]
    %v90 = vld [vmem:[#allocation5 + $0x78] sm:$0xff]
    %v91 = vld [vmem:[%s4] sm:$0x1]
    %v92 = vlaneseq
    %v93 = vshrl.u32 %v92, 7
    %v94 = vsub.s32 0, %v93
    %v95 = vrot.slane %v91, %v94
    %96 = vmatprep.subr.mxu0 0.0
    %97 = vmatpush1.msra.mxu0 %v75
    %98 = vmatprep.subr.mxu0 0.0
    %99 = vmatpush1.msra.mxu0 %v76
    %100 = vmatprep.subr.mxu0 0.0
    %101 = vmatpush1.msra.mxu0 %v77
    %102 = vmatprep.subr.mxu0 0.0
    %103 = vmatpush1.msra.mxu0 %v78
    %104 = vmatprep.subr.mxu0 0.0
    %105 = vmatpush1.msra.mxu0 %v79
    %106 = vmatprep.subr.mxu0 0.0
    %107 = vmatpush1.msra.mxu0 %v80
    %108 = vmatprep.subr.mxu0 0.0
    %109 = vmatpush1.msra.mxu0 %v81
    %110 = vmatprep.subr.mxu0 0.0
    %111 = vmatpush1.msra.mxu0 %v82
    %112 = vmatprep.subr.mxu0 0.0
    %113 = vmatpush1.msra.mxu0 %v83
    %114 = vmatprep.subr.mxu0 0.0
    %115 = vmatpush1.msra.mxu0 %v84
    %116 = vmatprep.subr.mxu0 0.0
    %117 = vmatpush1.msra.mxu0 %v85
    %118 = vmatprep.subr.mxu0 0.0
    %119 = vmatpush1.msra.mxu0 %v86
    %120 = vmatprep.subr.mxu0 0.0
    %121 = vmatpush1.msra.mxu0 %v87
    %122 = vmatprep.subr.mxu0 0.0
    %123 = vmatpush1.msra.mxu0 %v88
    %124 = vmatprep.subr.mxu0 0.0
    %125 = vmatpush1.msra.mxu0 %v89
    %126 = vmatprep.subr.mxu0 0.0
    %127 = vmatpush1.msra.mxu0 %v90
    %128 = vmatprep.subr.mxu0 0.0
    %129 = vmatpush1.msra.mxu0 0.0
    %130 = vmatprep.subr.mxu0 0.0
    %131 = vmatpush1.msra.mxu0 0.0
    %132 = vmatprep.subr.mxu0 0.0
    %133 = vmatpush1.msra.mxu0 0.0
    %134 = vmatprep.subr.mxu0 0.0
    %135 = vmatpush1.msra.mxu0 0.0
    %136 = vmatprep.subr.mxu0 0.0
    %137 = vmatpush1.msra.mxu0 0.0
    %138 = vmatprep.subr.mxu0 0.0
    %139 = vmatpush1.msra.mxu0 0.0
    %140 = vmatprep.subr.mxu0 0.0
    %141 = vmatpush1.msra.mxu0 0.0
    %142 = vmatprep.subr.mxu0 0.0
    %143 = vmatpush1.msra.mxu0 0.0
    %144 = vmatprep.subr.mxu0 0.0
    %145 = vmatpush1.msra.mxu0 0.0
    %146 = vmatprep.subr.mxu0 0.0
    %147 = vmatpush1.msra.mxu0 0.0
    %148 = vmatprep.subr.mxu0 0.0
    %149 = vmatpush1.msra.mxu0 0.0
    %150 = vmatprep.subr.mxu0 0.0
    %151 = vmatpush1.msra.mxu0 0.0
    %152 = vmatprep.subr.mxu0 0.0
    %153 = vmatpush1.msra.mxu0 0.0
    %154 = vmatprep.subr.mxu0 0.0
    %155 = vmatpush1.msra.mxu0 0.0
    %156 = vmatprep.subr.mxu0 0.0
    %157 = vmatpush1.msra.mxu0 0.0
    %158 = vmatprep.subr.mxu0 0.0
    %159 = vmatpush1.msra.mxu0 0.0
    %160 = vmatprep.mubr.f32.mxu0 0.0
    %161 = vmatmul.mubr.f32.gmra.mrb[0].mxu0 %v74
    %v162 = vpop.f32.mrb[0].mxu0
    %v163 = vadd.f32 %v95, %v162
    %v164 = vpop.f32.mrb[0].mxu0
    %165 = vdwg.mxu0
    %v166 = vmax.f32 %v163, 0.0
    %v167 = vld [vmem:[#allocation7] sm:$0xff]
    %v168 = vld [vmem:[#allocation7 + $0x8] sm:$0xff]
    %v169 = vld [vmem:[#allocation7 + $0x10] sm:$0xff]
    %v170 = vld [vmem:[#allocation7 + $0x18] sm:$0xff]
    %v171 = vld [vmem:[#allocation7 + $0x20] sm:$0xff]
    %v172 = vld [vmem:[#allocation7 + $0x28] sm:$0xff]
    %v173 = vld [vmem:[#allocation7 + $0x30] sm:$0xff]
    %v174 = vld [vmem:[#allocation7 + $0x38] sm:$0xff]
    %v175 = vld [vmem:[#allocation7 + $0x40] sm:$0xff]
    %v176 = vld [vmem:[#allocation7 + $0x48] sm:$0xff]
    %v177 = vld [vmem:[#allocation7 + $0x50] sm:$0xff]
    %v178 = vld [vmem:[#allocation7 + $0x58] sm:$0xff]
    %v179 = vld [vmem:[#allocation7 + $0x60] sm:$0xff]
    %v180 = vld [vmem:[#allocation7 + $0x68] sm:$0xff]
    %v181 = vld [vmem:[#allocation7 + $0x70] sm:$0xff]
    %v182 = vld [vmem:[#allocation7 + $0x78] sm:$0xff]
    %v183 = vld [vmem:[%s4 + $0x1] sm:$0x1]
    %v184 = vlaneseq
    %v185 = vshrl.u32 %v184, 7
    %v186 = vsub.s32 0, %v185
    %v187 = vrot.slane %v183, %v186
    %188 = vmatprep.subr.mxu0 0.0
    %189 = vmatpush1.msra.mxu0 %v167
    %190 = vmatprep.subr.mxu0 0.0
    %191 = vmatpush1.msra.mxu0 %v168
    %192 = vmatprep.subr.mxu0 0.0
    %193 = vmatpush1.msra.mxu0 %v169
    %194 = vmatprep.subr.mxu0 0.0
    %195 = vmatpush1.msra.mxu0 %v170
    %196 = vmatprep.subr.mxu0 0.0
    %197 = vmatpush1.msra.mxu0 %v171
    %198 = vmatprep.subr.mxu0 0.0
    %199 = vmatpush1.msra.mxu0 %v172
    %200 = vmatprep.subr.mxu0 0.0
    %201 = vmatpush1.msra.mxu0 %v173
    %202 = vmatprep.subr.mxu0 0.0
    %203 = vmatpush1.msra.mxu0 %v174
    %204 = vmatprep.subr.mxu0 0.0
    %205 = vmatpush1.msra.mxu0 %v175
    %206 = vmatprep.subr.mxu0 0.0
    %207 = vmatpush1.msra.mxu0 %v176
    %208 = vmatprep.subr.mxu0 0.0
    %209 = vmatpush1.msra.mxu0 %v177
    %210 = vmatprep.subr.mxu0 0.0
    %211 = vmatpush1.msra.mxu0 %v178
    %212 = vmatprep.subr.mxu0 0.0
    %213 = vmatpush1.msra.mxu0 %v179
    %214 = vmatprep.subr.mxu0 0.0
    %215 = vmatpush1.msra.mxu0 %v180
    %216 = vmatprep.subr.mxu0 0.0
    %217 = vmatpush1.msra.mxu0 %v181
    %218 = vmatprep.subr.mxu0 0.0
    %219 = vmatpush1.msra.mxu0 %v182
    %220 = vmatprep.subr.mxu0 0.0
    %221 = vmatpush1.msra.mxu0 0.0
    %222 = vmatprep.subr.mxu0 0.0
    %223 = vmatpush1.msra.mxu0 0.0
    %224 = vmatprep.subr.mxu0 0.0
    %225 = vmatpush1.msra.mxu0 0.0
    %226 = vmatprep.subr.mxu0 0.0
    %227 = vmatpush1.msra.mxu0 0.0
    %228 = vmatprep.subr.mxu0 0.0
    %229 = vmatpush1.msra.mxu0 0.0
    %230 = vmatprep.subr.mxu0 0.0
    %231 = vmatpush1.msra.mxu0 0.0
    %232 = vmatprep.subr.mxu0 0.0
    %233 = vmatpush1.msra.mxu0 0.0
    %234 = vmatprep.subr.mxu0 0.0
    %235 = vmatpush1.msra.mxu0 0.0
    %236 = vmatprep.subr.mxu0 0.0
    %237 = vmatpush1.msra.mxu0 0.0
    %238 = vmatprep.subr.mxu0 0.0
    %239 = vmatpush1.msra.mxu0 0.0
    %240 = vmatprep.subr.mxu0 0.0
    %241 = vmatpush1.msra.mxu0 0.0
    %242 = vmatprep.subr.mxu0 0.0
    %243 = vmatpush1.msra.mxu0 0.0
    %244 = vmatprep.subr.mxu0 0.0
    %245 = vmatpush1.msra.mxu0 0.0
    %246 = vmatprep.subr.mxu0 0.0
    %247 = vmatpush1.msra.mxu0 0.0
    %248 = vmatprep.subr.mxu0 0.0
    %249 = vmatpush1.msra.mxu0 0.0
    %250 = vmatprep.subr.mxu0 0.0
    %251 = vmatpush1.msra.mxu0 0.0
    %252 = vmatprep.mubr.f32.mxu0 0.0
    %253 = vmatmul.mubr.f32.gmra.mrb[0].mxu0 %v166
    %v254 = vpop.f32.mrb[0].mxu0
    %v255 = vadd.f32 %v187, %v254
    %v256 = vpop.f32.mrb[0].mxu0
    %257 = vdwg.mxu0
    %v258 = vmax.f32 %v255, 0.0
    %v259 = vld [vmem:[#allocation8] sm:$0xff]
    %v260 = vld [vmem:[#allocation8 + $0x8] sm:$0xff]
    %v261 = vld [vmem:[#allocation8 + $0x10] sm:$0xff]
    %v262 = vld [vmem:[#allocation8 + $0x18] sm:$0xff]
    %v263 = vld [vmem:[#allocation8 + $0x20] sm:$0xff]
    %v264 = vld [vmem:[#allocation8 + $0x28] sm:$0xff]
    %v265 = vld [vmem:[#allocation8 + $0x30] sm:$0xff]
    %v266 = vld [vmem:[#allocation8 + $0x38] sm:$0xff]
    %v267 = vld [vmem:[#allocation8 + $0x40] sm:$0xff]
    %v268 = vld [vmem:[#allocation8 + $0x48] sm:$0xff]
    %v269 = vld [vmem:[#allocation8 + $0x50] sm:$0xff]
    %v270 = vld [vmem:[#allocation8 + $0x58] sm:$0xff]
    %v271 = vld [vmem:[#allocation8 + $0x60] sm:$0xff]
    %v272 = vld [vmem:[#allocation8 + $0x68] sm:$0xff]
    %v273 = vld [vmem:[#allocation8 + $0x70] sm:$0xff]
    %v274 = vld [vmem:[#allocation8 + $0x78] sm:$0xff]
    %v275 = vld [vmem:[%s4 + $0x2] sm:$0x1]
    %v276 = vlaneseq
    %v277 = vshrl.u32 %v276, 7
    %v278 = vsub.s32 0, %v277
    %v279 = vrot.slane %v275, %v278
    %280 = vmatprep.subr.mxu0 0.0
    %281 = vmatpush1.msra.mxu0 %v259
    %282 = vmatprep.subr.mxu0 0.0
    %283 = vmatpush1.msra.mxu0 %v260
    %284 = vmatprep.subr.mxu0 0.0
    %285 = vmatpush1.msra.mxu0 %v261
    %286 = vmatprep.subr.mxu0 0.0
    %287 = vmatpush1.msra.mxu0 %v262
    %288 = vmatprep.subr.mxu0 0.0
    %289 = vmatpush1.msra.mxu0 %v263
    %290 = vmatprep.subr.mxu0 0.0
    %291 = vmatpush1.msra.mxu0 %v264
    %292 = vmatprep.subr.mxu0 0.0
    %293 = vmatpush1.msra.mxu0 %v265
    %294 = vmatprep.subr.mxu0 0.0
    %295 = vmatpush1.msra.mxu0 %v266
    %296 = vmatprep.subr.mxu0 0.0
    %297 = vmatpush1.msra.mxu0 %v267
    %298 = vmatprep.subr.mxu0 0.0
    %299 = vmatpush1.msra.mxu0 %v268
    %300 = vmatprep.subr.mxu0 0.0
    %301 = vmatpush1.msra.mxu0 %v269
    %302 = vmatprep.subr.mxu0 0.0
    %303 = vmatpush1.msra.mxu0 %v270
    %304 = vmatprep.subr.mxu0 0.0
    %305 = vmatpush1.msra.mxu0 %v271
    %306 = vmatprep.subr.mxu0 0.0
    %307 = vmatpush1.msra.mxu0 %v272
    %308 = vmatprep.subr.mxu0 0.0
    %309 = vmatpush1.msra.mxu0 %v273
    %310 = vmatprep.subr.mxu0 0.0
    %311 = vmatpush1.msra.mxu0 %v274
    %312 = vmatprep.subr.mxu0 0.0
    %313 = vmatpush1.msra.mxu0 0.0
    %314 = vmatprep.subr.mxu0 0.0
    %315 = vmatpush1.msra.mxu0 0.0
    %316 = vmatprep.subr.mxu0 0.0
    %317 = vmatpush1.msra.mxu0 0.0
    %318 = vmatprep.subr.mxu0 0.0
    %319 = vmatpush1.msra.mxu0 0.0
    %320 = vmatprep.subr.mxu0 0.0
    %321 = vmatpush1.msra.mxu0 0.0
    %322 = vmatprep.subr.mxu0 0.0
    %323 = vmatpush1.msra.mxu0 0.0
    %324 = vmatprep.subr.mxu0 0.0
    %325 = vmatpush1.msra.mxu0 0.0
    %326 = vmatprep.subr.mxu0 0.0
    %327 = vmatpush1.msra.mxu0 0.0
    %328 = vmatprep.subr.mxu0 0.0
    %329 = vmatpush1.msra.mxu0 0.0
    %330 = vmatprep.subr.mxu0 0.0
    %331 = vmatpush1.msra.mxu0 0.0
    %332 = vmatprep.subr.mxu0 0.0
    %333 = vmatpush1.msra.mxu0 0.0
    %334 = vmatprep.subr.mxu0 0.0
    %335 = vmatpush1.msra.mxu0 0.0
    %336 = vmatprep.subr.mxu0 0.0
    %337 = vmatpush1.msra.mxu0 0.0
    %338 = vmatprep.subr.mxu0 0.0
    %339 = vmatpush1.msra.mxu0 0.0
    %340 = vmatprep.subr.mxu0 0.0
    %341 = vmatpush1.msra.mxu0 0.0
    %342 = vmatprep.subr.mxu0 0.0
    %343 = vmatpush1.msra.mxu0 0.0
    %344 = vmatprep.mubr.f32.mxu0 0.0
    %345 = vmatmul.mubr.f32.gmra.mrb[0].mxu0 %v258
    %v346 = vpop.f32.mrb[0].mxu0
    %v347 = vadd.f32 %v279, %v346
    %v348 = vpop.f32.mrb[0].mxu0
    %349 = vdwg.mxu0
    %v350 = vmax.f32 %v347, 0.0
    %351 = vst [vmem:[#allocation10] sm:$0xff] %v350
    // Predicated region
    $region38: #{tpu_custom_call.1} parent=1 // pred_check
      _
    $region39: #{tpu_custom_call.1} parent=1 // pred_check_branch
      %353 = sbr.rel (0) target = $region41
    $region40: #{tpu_custom_call.1} parent=1 // pred_region
      %s355 = ssub.s32 128, 128
      %356 = vsyncadd [#allocation4], %s355
      %s358 = sshll.u32 [#allocation10], 4
      %s359 = int_to_ptr.vmem [resolvable:$true] %s358
      %361 = dma.vmem_to_hbm [thread:$0]  %s359, 128, %s5, [#allocation4]
    $region41: #{tpu_custom_call.1} parent=1 // pred_fallthru
      _
    // Predicated region
    $region42: #{tpu_custom_call.1} parent=1 // pred_check
      _
    $region43: #{tpu_custom_call.1} parent=1 // pred_check_branch
      %363 = sbr.rel (0) target = $region45
    $region44: #{tpu_custom_call.1} parent=1 // pred_region
      %364 = dma.done [#allocation4], 128
    $region45: #{tpu_custom_call.1} parent=1 // pred_fallthru
      _
    %365 = vsyncpa [#allocation3], 1
    %366 = vsyncpa [#allocation6], 1
    %367 = vsyncpa [#allocation9], 1
    %368 = vsyncpa [#allocation4], 1

// kernel: tpu_custom_call.1
$region0: #{tpu_custom_call.1}
  #allocation0 [shape = 'u32[]', space=smem, size = 0x4, offset = 0x4, fixed_abs, tag = 'smem constant byte address 0x4 - core index']
  #allocation1 [shape = 'u32[144,128]{1,0:T(1,128)}', space=vmem, size = 0x12000, scoped, tag = 'internal scratch']
  %s0 = inlined_call_operand.hbm [shape: f32[8,128], index: 0, kind: input, shape index: {}]
  %s1 = inlined_call_operand.hbm [shape: f32[128,128], index: 1, kind: input, shape index: {}]
  %s2 = inlined_call_operand.hbm [shape: f32[128,128], index: 2, kind: input, shape index: {}]
  %s3 = inlined_call_operand.hbm [shape: f32[128,128], index: 3, kind: input, shape index: {}]
  %s4 = inlined_call_operand.vmem [shape: f32[3,128], index: 4, kind: input, shape index: {}]
  %s5 = inlined_call_operand.hbm [shape: f32[8,128], index: 5, kind: output, shape index: {}]
  %s6 = sld [smem:[#allocation0]]
  $region46: #{tpu_custom_call.1} parent=0
    _
  %s8 = ssub.s32 1, %s6
  %s9 = scalar_select 0, %s8, %s6
  $region1: #{tpu_custom_call.1} parent=0
    #allocation2 [shape = 'u8[4096]{0}', space=vmem, size = 0x1000, scoped, tag = 'input window, operand 0, single buffered']
    #allocation3 [shape = 's32[1]{0}', space=sflag, size = 0x4, scoped, tag = 'scoped memory for tpu_custom_call.1']
    #allocation4 [shape = 's32[1]{0}', space=sflag, size = 0x4, scoped, tag = 'scoped memory for tpu_custom_call.1']
    #allocation5 [shape = 'u8[65536]{0}', space=vmem, size = 0x10000, scoped, tag = 'input window, operand 1, single buffered']
    #allocation6 [shape = 's32[1]{0}', space=sflag, size = 0x4, scoped, tag = 'scoped memory for tpu_custom_call.1']
    #allocation7 [shape = 'u8[65536]{0}', space=vmem, size = 0x10000, scoped, tag = 'input window, operand 2, single buffered']
    #allocation8 [shape = 'u8[65536]{0}', space=vmem, size = 0x10000, scoped, tag = 'input window, operand 3, single buffered']
    #allocation9 [shape = 's32[1]{0}', space=sflag, size = 0x4, scoped, tag = 'scoped memory for tpu_custom_call.1']
    #allocation10 [shape = 'u8[4096]{0}', space=vmem, size = 0x1000, scoped, tag = 'output window, operand 0, single buffered']
    %10 = vsyncpa [#allocation3], 0
    %11 = vsyncpa [#allocation6], 0
    %12 = vsyncpa [#allocation9], 0
    %13 = vsyncpa [#allocation4], 0
    // Predicated region
    $region2: #{tpu_custom_call.1} parent=1 // pred_check
      _
    $region3: #{tpu_custom_call.1} parent=1 // pred_check_branch
      %15 = sbr.rel (0) target = $region5
    $region4: #{tpu_custom_call.1} parent=1 // pred_region
      %s17 = ssub.s32 128, 128
      %18 = vsyncadd [#allocation3], %s17
      %s20 = sshll.u32 [#allocation2], 4
      %s21 = int_to_ptr.vmem [resolvable:$true] %s20
      %23 = dma.hbm_to_vmem [thread:$0]  %s0, 128, %s21, [#allocation3]
    $region5: #{tpu_custom_call.1} parent=1 // pred_fallthru
      _
    // Predicated region
    $region6: #{tpu_custom_call.1} parent=1 // pred_check
      _
    $region7: #{tpu_custom_call.1} parent=1 // pred_check_branch
      %25 = sbr.rel (0) target = $region9
    $region8: #{tpu_custom_call.1} parent=1 // pred_region
      %s27 = ssub.s32 2048, 2048
      %28 = vsyncadd [#allocation6], %s27
      %s29 = sshll.u32 [#allocation5], 4
      %s30 = int_to_ptr.vmem [resolvable:$true] %s29
      %35 = dma.hbm_to_vmem [thread:$0]  %s1, 2048, %s30, [#allocation6], 128, 128, 8
    $region9: #{tpu_custom_call.1} parent=1 // pred_fallthru
      _
    // Predicated region
    $region10: #{tpu_custom_call.1} parent=1 // pred_check
      _
    $region11: #{tpu_custom_call.1} parent=1 // pred_check_branch
      %37 = sbr.rel (0) target = $region13
    $region12: #{tpu_custom_call.1} parent=1 // pred_region
      %s39 = ssub.s32 2048, 2048
      %40 = vsyncadd [#allocation6], %s39
      %s41 = sshll.u32 [#allocation7], 4
      %s42 = int_to_ptr.vmem [resolvable:$true] %s41
      %47 = dma.hbm_to_vmem [thread:$0]  %s2, 2048, %s42, [#allocation6], 128, 128, 8
    $region13: #{tpu_custom_call.1} parent=1 // pred_fallthru
      _
    // Predicated region
    $region14: #{tpu_custom_call.1} parent=1 // pred_check
      _
    $region15: #{tpu_custom_call.1} parent=1 // pred_check_branch
      %49 = sbr.rel (0) target = $region17
    $region16: #{tpu_custom_call.1} parent=1 // pred_region
      %s51 = ssub.s32 2048, 2048
      %52 = vsyncadd [#allocation9], %s51
      %s53 = sshll.u32 [#allocation8], 4
      %s54 = int_to_ptr.vmem [resolvable:$true] %s53
      %59 = dma.hbm_to_vmem [thread:$0]  %s3, 2048, %s54, [#allocation9], 128, 128, 8
    $region17: #{tpu_custom_call.1} parent=1 // pred_fallthru
      _
    // Predicated region
    $region18: #{tpu_custom_call.1} parent=1 // pred_check
      _
    $region19: #{tpu_custom_call.1} parent=1 // pred_check_branch
      %61 = sbr.rel (0) target = $region21
    $region20: #{tpu_custom_call.1} parent=1 // pred_region
      _
    $region21: #{tpu_custom_call.1} parent=1 // pred_fallthru
      _
    // Predicated region
    $region22: #{tpu_custom_call.1} parent=1 // pred_check
      _
    $region23: #{tpu_custom_call.1} parent=1 // pred_check_branch
      %63 = sbr.rel (0) target = $region25
    $region24: #{tpu_custom_call.1} parent=1 // pred_region
      %64 = dma.done [#allocation3], 128
    $region25: #{tpu_custom_call.1} parent=1 // pred_fallthru
      _
    // Predicated region
    $region26: #{tpu_custom_call.1} parent=1 // pred_check
      _
    $region27: #{tpu_custom_call.1} parent=1 // pred_check_branch
      %66 = sbr.rel (0) target = $region29
    $region28: #{tpu_custom_call.1} parent=1 // pred_region
      %67 = dma.done [#allocation6], 2048
    $region29: #{tpu_custom_call.1} parent=1 // pred_fallthru
      _
    // Predicated region
    $region30: #{tpu_custom_call.1} parent=1 // pred_check
      _
    $region31: #{tpu_custom_call.1} parent=1 // pred_check_branch
      %69 = sbr.rel (0) target = $region33
    $region32: #{tpu_custom_call.1} parent=1 // pred_region
      %70 = dma.done [#allocation6], 2048
    $region33: #{tpu_custom_call.1} parent=1 // pred_fallthru
      _
    // Predicated region
    $region34: #{tpu_custom_call.1} parent=1 // pred_check
      _
    $region35: #{tpu_custom_call.1} parent=1 // pred_check_branch
      %72 = sbr.rel (0) target = $region37
    $region36: #{tpu_custom_call.1} parent=1 // pred_region
      %73 = dma.done [#allocation9], 2048
    $region37: #{tpu_custom_call.1} parent=1 // pred_fallthru
      _
    %v74 = vld [vmem:[#allocation2] sm:$0xff]
    %v75 = vld [vmem:[#allocation5] sm:$0xff]
    %v76 = vld [vmem:[#allocation5 + $0x8] sm:$0xff]
    %v77 = vld [vmem:[#allocation5 + $0x10] sm:$0xff]
    %v78 = vld [vmem:[#allocation5 + $0x18] sm:$0xff]
    %v79 = vld [vmem:[#allocation5 + $0x20] sm:$0xff]
    %v80 = vld [vmem:[#allocation5 + $0x28] sm:$0xff]
    %v81 = vld [vmem:[#allocation5 + $0x30] sm:$0xff]
    %v82 = vld [vmem:[#allocation5 + $0x38] sm:$0xff]
    %v83 = vld [vmem:[#allocation5 + $0x40] sm:$0xff]
    %v84 = vld [vmem:[#allocation5 + $0x48] sm:$0xff]
    %v85 = vld [vmem:[#allocation5 + $0x50] sm:$0xff]
    %v86 = vld [vmem:[#allocation5 + $0x58] sm:$0xff]
    %v87 = vld [vmem:[#allocation5 + $0x60] sm:$0xff]
    %v88 = vld [vmem:[#allocation5 + $0x68] sm:$0xff]
    %v89 = vld [vmem:[#allocation5 + $0x70] sm:$0xff]
    %v90 = vld [vmem:[#allocation5 + $0x78] sm:$0xff]
    %v91 = vld [vmem:[%s4] sm:$0x1]
    %v92 = vlaneseq
    %v93 = vshrl.u32 %v92, 7
    %v94 = vsub.s32 0, %v93
    %v95 = vrot.slane %v91, %v94
    %96 = vmatprep.subr.mxu0 0.0
    %97 = vmatpush1.msra.mxu0 %v75
    %98 = vmatprep.subr.mxu0 0.0
    %99 = vmatpush1.msra.mxu0 %v76
    %100 = vmatprep.subr.mxu0 0.0
    %101 = vmatpush1.msra.mxu0 %v77
    %102 = vmatprep.subr.mxu0 0.0
    %103 = vmatpush1.msra.mxu0 %v78
    %104 = vmatprep.subr.mxu0 0.0
    %105 = vmatpush1.msra.mxu0 %v79
    %106 = vmatprep.subr.mxu0 0.0
    %107 = vmatpush1.msra.mxu0 %v80
    %108 = vmatprep.subr.mxu0 0.0
    %109 = vmatpush1.msra.mxu0 %v81
    %110 = vmatprep.subr.mxu0 0.0
    %111 = vmatpush1.msra.mxu0 %v82
    %112 = vmatprep.subr.mxu0 0.0
    %113 = vmatpush1.msra.mxu0 %v83
    %114 = vmatprep.subr.mxu0 0.0
    %115 = vmatpush1.msra.mxu0 %v84
    %116 = vmatprep.subr.mxu0 0.0
    %117 = vmatpush1.msra.mxu0 %v85
    %118 = vmatprep.subr.mxu0 0.0
    %119 = vmatpush1.msra.mxu0 %v86
    %120 = vmatprep.subr.mxu0 0.0
    %121 = vmatpush1.msra.mxu0 %v87
    %122 = vmatprep.subr.mxu0 0.0
    %123 = vmatpush1.msra.mxu0 %v88
    %124 = vmatprep.subr.mxu0 0.0
    %125 = vmatpush1.msra.mxu0 %v89
    %126 = vmatprep.subr.mxu0 0.0
    %127 = vmatpush1.msra.mxu0 %v90
    %128 = vmatprep.subr.mxu0 0.0
    %129 = vmatpush1.msra.mxu0 0.0
    %130 = vmatprep.subr.mxu0 0.0
    %131 = vmatpush1.msra.mxu0 0.0
    %132 = vmatprep.subr.mxu0 0.0
    %133 = vmatpush1.msra.mxu0 0.0
    %134 = vmatprep.subr.mxu0 0.0
    %135 = vmatpush1.msra.mxu0 0.0
    %136 = vmatprep.subr.mxu0 0.0
    %137 = vmatpush1.msra.mxu0 0.0
    %138 = vmatprep.subr.mxu0 0.0
    %139 = vmatpush1.msra.mxu0 0.0
    %140 = vmatprep.subr.mxu0 0.0
    %141 = vmatpush1.msra.mxu0 0.0
    %142 = vmatprep.subr.mxu0 0.0
    %143 = vmatpush1.msra.mxu0 0.0
    %144 = vmatprep.subr.mxu0 0.0
    %145 = vmatpush1.msra.mxu0 0.0
    %146 = vmatprep.subr.mxu0 0.0
    %147 = vmatpush1.msra.mxu0 0.0
    %148 = vmatprep.subr.mxu0 0.0
    %149 = vmatpush1.msra.mxu0 0.0
    %150 = vmatprep.subr.mxu0 0.0
    %151 = vmatpush1.msra.mxu0 0.0
    %152 = vmatprep.subr.mxu0 0.0
    %153 = vmatpush1.msra.mxu0 0.0
    %154 = vmatprep.subr.mxu0 0.0
    %155 = vmatpush1.msra.mxu0 0.0
    %156 = vmatprep.subr.mxu0 0.0
    %157 = vmatpush1.msra.mxu0 0.0
    %158 = vmatprep.subr.mxu0 0.0
    %159 = vmatpush1.msra.mxu0 0.0
    %160 = vmatprep.mubr.f32.mxu0 0.0
    %161 = vmatmul.mubr.f32.gmra.mrb[0].mxu0 %v74
    %v162 = vpop.f32.mrb[0].mxu0
    %v163 = vadd.f32 %v95, %v162
    %v164 = vpop.f32.mrb[0].mxu0
    %165 = vdwg.mxu0
    %v166 = vmax.f32 %v163, 0.0
    %v167 = vld [vmem:[#allocation7] sm:$0xff]
    %v168 = vld [vmem:[#allocation7 + $0x8] sm:$0xff]
    %v169 = vld [vmem:[#allocation7 + $0x10] sm:$0xff]
    %v170 = vld [vmem:[#allocation7 + $0x18] sm:$0xff]
    %v171 = vld [vmem:[#allocation7 + $0x20] sm:$0xff]
    %v172 = vld [vmem:[#allocation7 + $0x28] sm:$0xff]
    %v173 = vld [vmem:[#allocation7 + $0x30] sm:$0xff]
    %v174 = vld [vmem:[#allocation7 + $0x38] sm:$0xff]
    %v175 = vld [vmem:[#allocation7 + $0x40] sm:$0xff]
    %v176 = vld [vmem:[#allocation7 + $0x48] sm:$0xff]
    %v177 = vld [vmem:[#allocation7 + $0x50] sm:$0xff]
    %v178 = vld [vmem:[#allocation7 + $0x58] sm:$0xff]
    %v179 = vld [vmem:[#allocation7 + $0x60] sm:$0xff]
    %v180 = vld [vmem:[#allocation7 + $0x68] sm:$0xff]
    %v181 = vld [vmem:[#allocation7 + $0x70] sm:$0xff]
    %v182 = vld [vmem:[#allocation7 + $0x78] sm:$0xff]
    %v183 = vld [vmem:[%s4 + $0x1] sm:$0x1]
    %v184 = vlaneseq
    %v185 = vshrl.u32 %v184, 7
    %v186 = vsub.s32 0, %v185
    %v187 = vrot.slane %v183, %v186
    %188 = vmatprep.subr.mxu0 0.0
    %189 = vmatpush1.msra.mxu0 %v167
    %190 = vmatprep.subr.mxu0 0.0
    %191 = vmatpush1.msra.mxu0 %v168
    %192 = vmatprep.subr.mxu0 0.0
    %193 = vmatpush1.msra.mxu0 %v169
    %194 = vmatprep.subr.mxu0 0.0
    %195 = vmatpush1.msra.mxu0 %v170
    %196 = vmatprep.subr.mxu0 0.0
    %197 = vmatpush1.msra.mxu0 %v171
    %198 = vmatprep.subr.mxu0 0.0
    %199 = vmatpush1.msra.mxu0 %v172
    %200 = vmatprep.subr.mxu0 0.0
    %201 = vmatpush1.msra.mxu0 %v173
    %202 = vmatprep.subr.mxu0 0.0
    %203 = vmatpush1.msra.mxu0 %v174
    %204 = vmatprep.subr.mxu0 0.0
    %205 = vmatpush1.msra.mxu0 %v175
    %206 = vmatprep.subr.mxu0 0.0
    %207 = vmatpush1.msra.mxu0 %v176
    %208 = vmatprep.subr.mxu0 0.0
    %209 = vmatpush1.msra.mxu0 %v177
    %210 = vmatprep.subr.mxu0 0.0
    %211 = vmatpush1.msra.mxu0 %v178
    %212 = vmatprep.subr.mxu0 0.0
    %213 = vmatpush1.msra.mxu0 %v179
    %214 = vmatprep.subr.mxu0 0.0
    %215 = vmatpush1.msra.mxu0 %v180
    %216 = vmatprep.subr.mxu0 0.0
    %217 = vmatpush1.msra.mxu0 %v181
    %218 = vmatprep.subr.mxu0 0.0
    %219 = vmatpush1.msra.mxu0 %v182
    %220 = vmatprep.subr.mxu0 0.0
    %221 = vmatpush1.msra.mxu0 0.0
    %222 = vmatprep.subr.mxu0 0.0
    %223 = vmatpush1.msra.mxu0 0.0
    %224 = vmatprep.subr.mxu0 0.0
    %225 = vmatpush1.msra.mxu0 0.0
    %226 = vmatprep.subr.mxu0 0.0
    %227 = vmatpush1.msra.mxu0 0.0
    %228 = vmatprep.subr.mxu0 0.0
    %229 = vmatpush1.msra.mxu0 0.0
    %230 = vmatprep.subr.mxu0 0.0
    %231 = vmatpush1.msra.mxu0 0.0
    %232 = vmatprep.subr.mxu0 0.0
    %233 = vmatpush1.msra.mxu0 0.0
    %234 = vmatprep.subr.mxu0 0.0
    %235 = vmatpush1.msra.mxu0 0.0
    %236 = vmatprep.subr.mxu0 0.0
    %237 = vmatpush1.msra.mxu0 0.0
    %238 = vmatprep.subr.mxu0 0.0
    %239 = vmatpush1.msra.mxu0 0.0
    %240 = vmatprep.subr.mxu0 0.0
    %241 = vmatpush1.msra.mxu0 0.0
    %242 = vmatprep.subr.mxu0 0.0
    %243 = vmatpush1.msra.mxu0 0.0
    %244 = vmatprep.subr.mxu0 0.0
    %245 = vmatpush1.msra.mxu0 0.0
    %246 = vmatprep.subr.mxu0 0.0
    %247 = vmatpush1.msra.mxu0 0.0
    %248 = vmatprep.subr.mxu0 0.0
    %249 = vmatpush1.msra.mxu0 0.0
    %250 = vmatprep.subr.mxu0 0.0
    %251 = vmatpush1.msra.mxu0 0.0
    %252 = vmatprep.mubr.f32.mxu0 0.0
    %253 = vmatmul.mubr.f32.gmra.mrb[0].mxu0 %v166
    %v254 = vpop.f32.mrb[0].mxu0
    %v255 = vadd.f32 %v187, %v254
    %v256 = vpop.f32.mrb[0].mxu0
    %257 = vdwg.mxu0
    %v258 = vmax.f32 %v255, 0.0
    %v259 = vld [vmem:[#allocation8] sm:$0xff]
    %v260 = vld [vmem:[#allocation8 + $0x8] sm:$0xff]
    %v261 = vld [vmem:[#allocation8 + $0x10] sm:$0xff]
    %v262 = vld [vmem:[#allocation8 + $0x18] sm:$0xff]
    %v263 = vld [vmem:[#allocation8 + $0x20] sm:$0xff]
    %v264 = vld [vmem:[#allocation8 + $0x28] sm:$0xff]
    %v265 = vld [vmem:[#allocation8 + $0x30] sm:$0xff]
    %v266 = vld [vmem:[#allocation8 + $0x38] sm:$0xff]
    %v267 = vld [vmem:[#allocation8 + $0x40] sm:$0xff]
    %v268 = vld [vmem:[#allocation8 + $0x48] sm:$0xff]
    %v269 = vld [vmem:[#allocation8 + $0x50] sm:$0xff]
    %v270 = vld [vmem:[#allocation8 + $0x58] sm:$0xff]
    %v271 = vld [vmem:[#allocation8 + $0x60] sm:$0xff]
    %v272 = vld [vmem:[#allocation8 + $0x68] sm:$0xff]
    %v273 = vld [vmem:[#allocation8 + $0x70] sm:$0xff]
    %v274 = vld [vmem:[#allocation8 + $0x78] sm:$0xff]
    %v275 = vld [vmem:[%s4 + $0x2] sm:$0x1]
    %v276 = vlaneseq
    %v277 = vshrl.u32 %v276, 7
    %v278 = vsub.s32 0, %v277
    %v279 = vrot.slane %v275, %v278
    %280 = vmatprep.subr.mxu0 0.0
    %281 = vmatpush1.msra.mxu0 %v259
    %282 = vmatprep.subr.mxu0 0.0
    %283 = vmatpush1.msra.mxu0 %v260
    %284 = vmatprep.subr.mxu0 0.0
    %285 = vmatpush1.msra.mxu0 %v261
    %286 = vmatprep.subr.mxu0 0.0
    %287 = vmatpush1.msra.mxu0 %v262
    %288 = vmatprep.subr.mxu0 0.0
    %289 = vmatpush1.msra.mxu0 %v263
    %290 = vmatprep.subr.mxu0 0.0
    %291 = vmatpush1.msra.mxu0 %v264
    %292 = vmatprep.subr.mxu0 0.0
    %293 = vmatpush1.msra.mxu0 %v265
    %294 = vmatprep.subr.mxu0 0.0
    %295 = vmatpush1.msra.mxu0 %v266
    %296 = vmatprep.subr.mxu0 0.0
    %297 = vmatpush1.msra.mxu0 %v267
    %298 = vmatprep.subr.mxu0 0.0
    %299 = vmatpush1.msra.mxu0 %v268
    %300 = vmatprep.subr.mxu0 0.0
    %301 = vmatpush1.msra.mxu0 %v269
    %302 = vmatprep.subr.mxu0 0.0
    %303 = vmatpush1.msra.mxu0 %v270
    %304 = vmatprep.subr.mxu0 0.0
    %305 = vmatpush1.msra.mxu0 %v271
    %306 = vmatprep.subr.mxu0 0.0
    %307 = vmatpush1.msra.mxu0 %v272
    %308 = vmatprep.subr.mxu0 0.0
    %309 = vmatpush1.msra.mxu0 %v273
    %310 = vmatprep.subr.mxu0 0.0
    %311 = vmatpush1.msra.mxu0 %v274
    %312 = vmatprep.subr.mxu0 0.0
    %313 = vmatpush1.msra.mxu0 0.0
    %314 = vmatprep.subr.mxu0 0.0
    %315 = vmatpush1.msra.mxu0 0.0
    %316 = vmatprep.subr.mxu0 0.0
    %317 = vmatpush1.msra.mxu0 0.0
    %318 = vmatprep.subr.mxu0 0.0
    %319 = vmatpush1.msra.mxu0 0.0
    %320 = vmatprep.subr.mxu0 0.0
    %321 = vmatpush1.msra.mxu0 0.0
    %322 = vmatprep.subr.mxu0 0.0
    %323 = vmatpush1.msra.mxu0 0.0
    %324 = vmatprep.subr.mxu0 0.0
    %325 = vmatpush1.msra.mxu0 0.0
    %326 = vmatprep.subr.mxu0 0.0
    %327 = vmatpush1.msra.mxu0 0.0
    %328 = vmatprep.subr.mxu0 0.0
    %329 = vmatpush1.msra.mxu0 0.0
    %330 = vmatprep.subr.mxu0 0.0
    %331 = vmatpush1.msra.mxu0 0.0
    %332 = vmatprep.subr.mxu0 0.0
    %333 = vmatpush1.msra.mxu0 0.0
    %334 = vmatprep.subr.mxu0 0.0
    %335 = vmatpush1.msra.mxu0 0.0
    %336 = vmatprep.subr.mxu0 0.0
    %337 = vmatpush1.msra.mxu0 0.0
    %338 = vmatprep.subr.mxu0 0.0
    %339 = vmatpush1.msra.mxu0 0.0
    %340 = vmatprep.subr.mxu0 0.0
    %341 = vmatpush1.msra.mxu0 0.0
    %342 = vmatprep.subr.mxu0 0.0
    %343 = vmatpush1.msra.mxu0 0.0
    %344 = vmatprep.mubr.f32.mxu0 0.0
    %345 = vmatmul.mubr.f32.gmra.mrb[0].mxu0 %v258
    %v346 = vpop.f32.mrb[0].mxu0
    %v347 = vadd.f32 %v279, %v346
    %v348 = vpop.f32.mrb[0].mxu0
    %349 = vdwg.mxu0
    %v350 = vmax.f32 %v347, 0.0
    %351 = vst [vmem:[#allocation10] sm:$0xff] %v350
    // Predicated region
    $region38: #{tpu_custom_call.1} parent=1 // pred_check
      _
    $region39: #{tpu_custom_call.1} parent=1 // pred_check_branch
      %353 = sbr.rel (0) target = $region41
    $region40: #{tpu_custom_call.1} parent=1 // pred_region
      %s355 = ssub.s32 128, 128
      %356 = vsyncadd [#allocation4], %s355
      %s358 = sshll.u32 [#allocation10], 4
      %s359 = int_to_ptr.vmem [resolvable:$true] %s358
      %361 = dma.vmem_to_hbm [thread:$0]  %s359, 128, %s5, [#allocation4]
    $region41: #{tpu_custom_call.1} parent=1 // pred_fallthru
      _
    // Predicated region
    $region42: #{tpu_custom_call.1} parent=1 // pred_check
      _
    $region43: #{tpu_custom_call.1} parent=1 // pred_check_branch
      %363 = sbr.rel (0) target = $region45
    $region44: #{tpu_custom_call.1} parent=1 // pred_region
      %364 = dma.done [#allocation4], 128
    $region45: #{tpu_custom_call.1} parent=1 // pred_fallthru
      _
    %365 = vsyncpa [#allocation3], 1
    %366 = vsyncpa [#allocation6], 1
    %367 = vsyncpa [#allocation9], 1
    %368 = vsyncpa [#allocation4], 1

</llo_original>
